<compile_context>
chip_gen: v6e
topology: v6e:2x2x1
jax: 0.10.0
libtpu: 0.0.40
codegen_flags: <defaults>
</compile_context>

<pallas_src>
import jax
import jax.numpy as jnp
from jax import lax
from jax.experimental import pallas as pl
from jax.experimental.pallas import tpu as pltpu


def _make_loss_kernel(num_classes: int, inv_n: float, tn: int, nn_valid: int,
                      needs_mask: bool):
    C = num_classes
    CH = 5 + num_classes

    def loss_kernel(pred_ref, tgt_ref, out_ref, acc_ref):
        n = pl.program_id(1)

        @pl.when(n == 0)
        def _init():
            acc_ref[...] = jnp.zeros_like(acc_ref)

        # Channel-group loads straight from the refs (no full-tile slice that
        # crosses the 8-sublane tile boundary at row 5..CH-1).
        conf_p = pred_ref[0:1, :].astype(jnp.float32)    # [1, TN]
        reg_p = pred_ref[1:5, :].astype(jnp.float32)     # [4, TN]
        cls_p = pred_ref[5:CH, :].astype(jnp.float32)    # [C, TN]
        conf_t = tgt_ref[0:1, :].astype(jnp.float32)
        reg_t = tgt_ref[1:5, :].astype(jnp.float32)
        cls_t = tgt_ref[5:CH, :].astype(jnp.float32)

        valid = (conf_t >= 0.5).astype(jnp.float32)      # [1, TN]

        # ---- fused masked MSE terms ------------------------------------
        # (a*v - b*v)^2 == v*(a-b)^2 since v is 0/1; confidence is unmasked.
        # The cross-sublane sum over the 4 regression rows is deferred to the
        # finalize block (row-wise accumulation below).
        d_conf = conf_p - conf_t                         # [1, TN]
        d_reg = reg_p - reg_t                            # [4, TN]
        reg_sq = valid * (d_reg * d_reg)                 # [4, TN]

        # ---- cross-entropy (target = first argmax of masked class tgts) --
        logits = cls_p * valid                           # [C, TN]
        cls_tv = cls_t * valid                           # [C, TN]
        iota_c = lax.broadcasted_iota(jnp.int32, (C, tn), 0)
        max_t = jnp.max(cls_tv, axis=0, keepdims=True)            # [1, TN]
        tgt_idx = jnp.min(jnp.where(cls_tv == max_t, iota_c, C),
                          axis=0, keepdims=True)                  # [1, TN]
        picked = jnp.sum(jnp.where(iota_c == tgt_idx, logits, 0.0),
                         axis=0, keepdims=True)                   # [1, TN]
        m = jnp.max(logits, axis=0, keepdims=True)
        lse = m + jnp.log(jnp.sum(jnp.exp(logits - m), axis=0, keepdims=True))
        ce_lane = lse - picked                                    # [1, TN]

        if needs_mask:
            # Lanes beyond the true G*G extent: the squared diffs are already
            # zero (both inputs zero-padded); only the CE term (log C on
            # all-zero logits) needs masking out.
            lane = lax.broadcasted_iota(jnp.int32, (1, tn), 1) + n * tn
            ce_lane = jnp.where(lane < nn_valid, ce_lane, 0.0)

        # ---- lane-dense, row-wise accumulation (pure VPU adds) ----------
        acc_ref[0:4, :] += reg_sq
        acc_ref[4:5, :] += d_conf * d_conf + ce_lane

        @pl.when(n == pl.num_programs(1) - 1)
        def _finalize():
            total = jnp.sum(acc_ref[...]) * jnp.float32(inv_n)
            sub_i = lax.broadcasted_iota(jnp.int32, (8, 128), 0)
            lane_i = lax.broadcasted_iota(jnp.int32, (8, 128), 1)
            # Per-b partial lives at [0, 0]; rest of the tile written as 0 so
            # the wrapper can simply sum the whole output.
            out_ref[...] = jnp.where((sub_i == 0) & (lane_i == 0), total, 0.0)

    return loss_kernel


def directional_corner_detection_loss(pred, targets, num_classes):
    """pred, targets: [B, 5 + num_classes, G, G] (NCHW layout)."""
    B, CH, G, G2 = pred.shape
    assert G == G2 and CH == 5 + num_classes
    NN = G * G
    N = B * NN

    # Free, contiguity-preserving reshape: no extra HBM transpose pass.
    p_r = pred.reshape(B, CH, NN)
    t_r = targets.reshape(B, CH, NN)

    # Lane tile: pad the sample axis to a multiple of 128 and pick the largest
    # tile (cap 16 Ki lanes) dividing the padded extent.  Even TN=16384 is
    # ~1 MiB per input buffer, so double-buffering 2 inputs stays ~4 MiB.
    NN_pad = -(-NN // 128) * 128
    if NN_pad <= 16384:
        TN = NN_pad
    else:
        TN = next(c for c in (16384, 8192, 4096, 2048, 1024, 512, 256, 128)
                  if NN_pad % c == 0)
    NT = NN_pad // TN
    needs_mask = NN_pad != NN
    if needs_mask:
        # Only triggers for non-128-divisible G*G; padded lanes are masked
        # inside the kernel so they contribute exactly zero.
        pad = [(0, 0), (0, 0), (0, NN_pad - NN)]
        p_r = jnp.pad(p_r, pad)
        t_r = jnp.pad(t_r, pad)

    kernel = _make_loss_kernel(num_classes, 1.0 / N, TN, NN, needs_mask)

    # Footprint: 2 inputs x 2 buffers x ceil(CH/8)*8 x TN x 4 B  +  8*TN*4 acc
    # <= ~6 MiB at TN=16384; 32 MiB scoped limit leaves ample headroom on
    # every generation (v5e/v6e/v7x).
    vmem_limit = 32 * 1024 * 1024

    partials = pl.pallas_call(
        kernel,
        out_shape=jax.ShapeDtypeStruct((B, 8, 128), jnp.float32),
        grid_spec=pltpu.PrefetchScalarGridSpec(
            num_scalar_prefetch=0,
            grid=(B, NT),
            in_specs=[
                pl.BlockSpec((pl.Squeezed(), CH, TN), lambda b, n: (b, 0, n)),
                pl.BlockSpec((pl.Squeezed(), CH, TN), lambda b, n: (b, 0, n)),
            ],
            out_specs=pl.BlockSpec((pl.Squeezed(), 8, 128),
                                   lambda b, n: (b, 0, 0)),
            scratch_shapes=[pltpu.VMEM((8, TN), jnp.float32)],
        ),
        # B axis "parallel" -> per-b partials can run on both v7x TensorCores;
        # the lane-tile (reduction) axis stays "arbitrary" for the per-b
        # accumulator.  (pipeline_mode=pl.Buffered(3) on the input specs is a
        # possible follow-on if the short strided DMAs remain exposed.)
        compiler_params=pltpu.CompilerParams(
            dimension_semantics=("parallel", "arbitrary"),
            vmem_limit_bytes=vmem_limit),
    )(p_r, t_r)
    # Per-b partial sits at [b, 0, 0]; remaining entries are exact zeros.
    return jnp.sum(partials)


def _reference_loss(pred, targets, num_classes):
    """Pure-JAX reference mirroring the PyTorch module."""
    conf_p = pred[:, 0]
    x_p, y_p, cos_p, sin_p = (pred[:, i] for i in range(1, 5))
    cls_p = pred[:, 5:]
    conf_t = targets[:, 0]
    x_t, y_t, cos_t, sin_t = (targets[:, i] for i in range(1, 5))
    cls_t = targets[:, 5:]
    valid = (conf_t >= 0.5).astype(jnp.float32)

    mse = lambda a, b: jnp.mean((a - b) ** 2)
    x_loss = mse(x_p * valid, x_t * valid)
    y_loss = mse(y_p * valid, y_t * valid)
    cos_loss = mse(cos_p * valid, cos_t * valid)
    sin_loss = mse(sin_p * valid, sin_t * valid)
    conf_loss = mse(conf_p, conf_t)

    logits = (cls_p * valid[:, None]).transpose(0, 2, 3, 1).reshape(-1, num_classes)
    tgt = jnp.argmax((cls_t * valid[:, None]).transpose(0, 2, 3, 1), axis=-1).reshape(-1)
    logp = jax.nn.log_softmax(logits, axis=-1)
    class_loss = -jnp.mean(jnp.take_along_axis(logp, tgt[:, None], axis=1))
    return x_loss + y_loss + cos_loss + sin_loss + conf_loss + class_loss


if __name__ == "__main__":
    num_classes = 4
    B, G = 2, 16
    CH = 5 + num_classes

    key = jax.random.PRNGKey(0)
    k1, k2, k3 = jax.random.split(key, 3)
    pred = jax.random.normal(k1, (B, CH, G, G), dtype=jnp.float32)

    # Targets: confidence in [0,1], small regression targets, one-hot classes.
    conf_t = jax.random.uniform(k2, (B, 1, G, G), dtype=jnp.float32)
    reg_t = jax.random.normal(k3, (B, 4, G, G), dtype=jnp.float32) * 0.5
    cls_idx = jax.random.randint(jax.random.PRNGKey(7), (B, G, G), 0, num_classes)
    cls_t = jax.nn.one_hot(cls_idx, num_classes, dtype=jnp.float32)
    cls_t = jnp.transpose(cls_t, (0, 3, 1, 2))
    targets = jnp.concatenate([conf_t, reg_t, cls_t], axis=1)

    loss = directional_corner_detection_loss(pred, targets, num_classes)
    loss = jax.block_until_ready(loss)

    ref = jax.block_until_ready(_reference_loss(pred, targets, num_classes))
    assert jnp.allclose(loss, ref, atol=1e-4, rtol=1e-4), (loss, ref)

    print("KERNEL_OK")
</pallas_src>

<mosaic_0001>
module attributes {stable_mosaic.version = 11 : i64} {
  func.func @loss_kernel(%arg0: i32, %arg1: i32, %arg2: memref<1x9x256xf32, #tpu.memory_space<vmem>>, %arg3: memref<1x9x256xf32, #tpu.memory_space<vmem>>, %arg4: memref<1x8x128xf32, #tpu.memory_space<vmem>>, %arg5: memref<8x256xf32, #tpu.memory_space<vmem>>) attributes {dimension_semantics = [#tpu.dimension_semantics<parallel>, #tpu.dimension_semantics<arbitrary>], iteration_bounds = array<i64: 2, 1>, scalar_prefetch = 0 : i64, scratch_operands = 1 : i64, tpu.core_type = #tpu.core_type<tc>, window_params = [{transform_indices = @transform_0, window_bounds = array<i64: 1, 9, 256>}, {transform_indices = @transform_1, window_bounds = array<i64: 1, 9, 256>}, {transform_indices = @transform_2, window_bounds = array<i64: 1, 8, 128>}]} {
    %c0_i32 = arith.constant 0 : i32
    %0 = arith.cmpi eq, %arg1, %c0_i32 : i32
    %1 = arith.extui %0 : i1 to i32
    %c0_i32_0 = arith.constant 0 : i32
    %2 = arith.cmpi ne, %1, %c0_i32_0 : i32
    scf.if %2 {
      %cst_31 = arith.constant 0.000000e+00 : f32
      %64 = vector.broadcast %cst_31 : f32 to vector<8x256xf32>
      %c0_32 = arith.constant 0 : index
      %c0_33 = arith.constant 0 : index
      %65 = vector.load %arg5[%c0_32, %c0_33] : memref<8x256xf32, #tpu.memory_space<vmem>>, vector<8x256xf32>
      tpu.vector_store %arg5[%c0_32, %c0_33], %64 {strides = array<i32>} : memref<8x256xf32, #tpu.memory_space<vmem>>, vector<8x256xf32>,
    } else {
    }
    %c0 = arith.constant 0 : index
    %c0_1 = arith.constant 0 : index
    %c0_2 = arith.constant 0 : index
    %3 = vector.load %arg2[%c0, %c0_1, %c0_2] : memref<1x9x256xf32, #tpu.memory_space<vmem>>, vector<1x1x256xf32>
    %4 = vector.shape_cast %3 : vector<1x1x256xf32> to vector<1x256xf32>
    %c0_3 = arith.constant 0 : index
    %c1 = arith.constant 1 : index
    %c0_4 = arith.constant 0 : index
    %5 = vector.load %arg2[%c0_3, %c1, %c0_4] : memref<1x9x256xf32, #tpu.memory_space<vmem>>, vector<1x4x256xf32>
    %6 = vector.shape_cast %5 : vector<1x4x256xf32> to vector<4x256xf32>
    %c0_5 = arith.constant 0 : index
    %c5 = arith.constant 5 : index
    %c0_6 = arith.constant 0 : index
    %7 = vector.load %arg2[%c0_5, %c5, %c0_6] : memref<1x9x256xf32, #tpu.memory_space<vmem>>, vector<1x4x256xf32>
    %8 = vector.shape_cast %7 : vector<1x4x256xf32> to vector<4x256xf32>
    %c0_7 = arith.constant 0 : index
    %c0_8 = arith.constant 0 : index
    %c0_9 = arith.constant 0 : index
    %9 = vector.load %arg3[%c0_7, %c0_8, %c0_9] : memref<1x9x256xf32, #tpu.memory_space<vmem>>, vector<1x1x256xf32>
    %10 = vector.shape_cast %9 : vector<1x1x256xf32> to vector<1x256xf32>
    %c0_10 = arith.constant 0 : index
    %c1_11 = arith.constant 1 : index
    %c0_12 = arith.constant 0 : index
    %11 = vector.load %arg3[%c0_10, %c1_11, %c0_12] : memref<1x9x256xf32, #tpu.memory_space<vmem>>, vector<1x4x256xf32>
    %12 = vector.shape_cast %11 : vector<1x4x256xf32> to vector<4x256xf32>
    %c0_13 = arith.constant 0 : index
    %c5_14 = arith.constant 5 : index
    %c0_15 = arith.constant 0 : index
    %13 = vector.load %arg3[%c0_13, %c5_14, %c0_15] : memref<1x9x256xf32, #tpu.memory_space<vmem>>, vector<1x4x256xf32>
    %14 = vector.shape_cast %13 : vector<1x4x256xf32> to vector<4x256xf32>
    %cst = arith.constant 5.000000e-01 : f32
    %15 = vector.broadcast %cst : f32 to vector<1x256xf32>
    %16 = arith.cmpf oge, %10, %15 : vector<1x256xf32>
    %17 = arith.extui %16 : vector<1x256xi1> to vector<1x256xi32>
    %18 = arith.sitofp %17 : vector<1x256xi32> to vector<1x256xf32>
    %19 = arith.subf %4, %10 : vector<1x256xf32>
    %20 = arith.subf %6, %12 : vector<4x256xf32>
    %21 = arith.mulf %20, %20 : vector<4x256xf32>
    %22 = vector.broadcast %18 : vector<1x256xf32> to vector<4x256xf32>
    %23 = arith.mulf %22, %21 : vector<4x256xf32>
    %24 = vector.broadcast %18 : vector<1x256xf32> to vector<4x256xf32>
    %25 = arith.mulf %8, %24 : vector<4x256xf32>
    %26 = vector.broadcast %18 : vector<1x256xf32> to vector<4x256xf32>
    %27 = arith.mulf %14, %26 : vector<4x256xf32>
    %28 = tpu.iota {dimensions = array<i32: 0>} : vector<4x256xi32>
    %cst_16 = arith.constant dense<0xFF800000> : vector<256xf32>
    %29 = vector.multi_reduction <maximumf>, %27, %cst_16 [0] : vector<4x256xf32> to vector<256xf32>
    %30 = vector.shape_cast %29 : vector<256xf32> to vector<1x256xf32>
    %31 = vector.broadcast %30 : vector<1x256xf32> to vector<4x256xf32>
    %32 = arith.cmpf oeq, %27, %31 : vector<4x256xf32>
    %c4_i32 = arith.constant 4 : i32
    %33 = vector.broadcast %c4_i32 : i32 to vector<4x256xi32>
    %34 = arith.select %32, %28, %33 : vector<4x256xi1>, vector<4x256xi32>
    %cst_17 = arith.constant dense<2147483647> : vector<256xi32>
    %35 = vector.multi_reduction <minsi>, %34, %cst_17 [0] : vector<4x256xi32> to vector<256xi32>
    %36 = vector.shape_cast %35 : vector<256xi32> to vector<1x256xi32>
    %37 = vector.broadcast %36 : vector<1x256xi32> to vector<4x256xi32>
    %38 = arith.cmpi eq, %28, %37 : vector<4x256xi32>
    %cst_18 = arith.constant 0.000000e+00 : f32
    %39 = vector.broadcast %cst_18 : f32 to vector<4x256xf32>
    %40 = arith.select %38, %25, %39 : vector<4x256xi1>, vector<4x256xf32>
    %cst_19 = arith.constant dense<0.000000e+00> : vector<256xf32>
    %41 = vector.multi_reduction <add>, %40, %cst_19 [0] : vector<4x256xf32> to vector<256xf32>
    %42 = vector.shape_cast %41 : vector<256xf32> to vector<1x256xf32>
    %cst_20 = arith.constant dense<0xFF800000> : vector<256xf32>
    %43 = vector.multi_reduction <maximumf>, %25, %cst_20 [0] : vector<4x256xf32> to vector<256xf32>
    %44 = vector.shape_cast %43 : vector<256xf32> to vector<1x256xf32>
    %45 = vector.broadcast %44 : vector<1x256xf32> to vector<4x256xf32>
    %46 = arith.subf %25, %45 : vector<4x256xf32>
    %47 = math.exp %46 : vector<4x256xf32>
    %cst_21 = arith.constant dense<0.000000e+00> : vector<256xf32>
    %48 = vector.multi_reduction <add>, %47, %cst_21 [0] : vector<4x256xf32> to vector<256xf32>
    %49 = vector.shape_cast %48 : vector<256xf32> to vector<1x256xf32>
    %50 = math.log %49 : vector<1x256xf32>
    %51 = arith.addf %44, %50 : vector<1x256xf32>
    %52 = arith.subf %51, %42 : vector<1x256xf32>
    %c0_22 = arith.constant 0 : index
    %c0_23 = arith.constant 0 : index
    %53 = vector.load %arg5[%c0_22, %c0_23] : memref<8x256xf32, #tpu.memory_space<vmem>>, vector<4x256xf32>
    %54 = arith.addf %53, %23 : vector<4x256xf32>
    %c0_24 = arith.constant 0 : index
    %c0_25 = arith.constant 0 : index
    %55 = vector.load %arg5[%c0_24, %c0_25] : memref<8x256xf32, #tpu.memory_space<vmem>>, vector<4x256xf32>
    tpu.vector_store %arg5[%c0_24, %c0_25], %54 {strides = array<i32>} : memref<8x256xf32, #tpu.memory_space<vmem>>, vector<4x256xf32>,
    %c4 = arith.constant 4 : index
    %c0_26 = arith.constant 0 : index
    %56 = vector.load %arg5[%c4, %c0_26] : memref<8x256xf32, #tpu.memory_space<vmem>>, vector<1x256xf32>
    %57 = arith.mulf %19, %19 : vector<1x256xf32>
    %58 = arith.addf %57, %52 : vector<1x256xf32>
    %59 = arith.addf %56, %58 : vector<1x256xf32>
    %c4_27 = arith.constant 4 : index
    %c0_28 = arith.constant 0 : index
    %60 = vector.load %arg5[%c4_27, %c0_28] : memref<8x256xf32, #tpu.memory_space<vmem>>, vector<1x256xf32>
    tpu.vector_store %arg5[%c4_27, %c0_28], %59 {strides = array<i32>} : memref<8x256xf32, #tpu.memory_space<vmem>>, vector<1x256xf32>,
    %c0_i32_29 = arith.constant 0 : i32
    %61 = arith.cmpi eq, %arg1, %c0_i32_29 : i32
    %62 = arith.extui %61 : i1 to i32
    %c0_i32_30 = arith.constant 0 : i32
    %63 = arith.cmpi ne, %62, %c0_i32_30 : i32
    scf.if %63 {
      %c0_31 = arith.constant 0 : index
      %c0_32 = arith.constant 0 : index
      %64 = vector.load %arg5[%c0_31, %c0_32] : memref<8x256xf32, #tpu.memory_space<vmem>>, vector<8x256xf32>
      %65 = vector.shape_cast %64 : vector<8x256xf32> to vector<1x8x256xf32>
      %cst_33 = arith.constant dense<0.000000e+00> : vector<1xf32>
      %66 = vector.multi_reduction <add>, %65, %cst_33 [1, 2] : vector<1x8x256xf32> to vector<1xf32>
      %67 = vector.shape_cast %66 : vector<1xf32> to vector<1x1x1xf32>
      %68 = vector.extract %67[0, 0, 0] : f32 from vector<1x1x1xf32>
      %cst_34 = arith.constant 0.001953125 : f32
      %69 = arith.mulf %68, %cst_34 : f32
      %70 = tpu.iota {dimensions = array<i32: 0>} : vector<8x128xi32>
      %71 = tpu.iota {dimensions = array<i32: 1>} : vector<8x128xi32>
      %c0_i32_35 = arith.constant 0 : i32
      %72 = vector.broadcast %c0_i32_35 : i32 to vector<8x128xi32>
      %73 = arith.cmpi eq, %70, %72 : vector<8x128xi32>
      %c0_i32_36 = arith.constant 0 : i32
      %74 = vector.broadcast %c0_i32_36 : i32 to vector<8x128xi32>
      %75 = arith.cmpi eq, %71, %74 : vector<8x128xi32>
      %76 = arith.andi %73, %75 : vector<8x128xi1>
      %cst_37 = arith.constant 0.000000e+00 : f32
      %77 = vector.broadcast %69 : f32 to vector<8x128xf32>
      %78 = vector.broadcast %cst_37 : f32 to vector<8x128xf32>
      %79 = arith.select %76, %77, %78 : vector<8x128xi1>, vector<8x128xf32>
      %c0_38 = arith.constant 0 : index
      %c0_39 = arith.constant 0 : index
      %c0_40 = arith.constant 0 : index
      %80 = vector.load %arg4[%c0_38, %c0_39, %c0_40] : memref<1x8x128xf32, #tpu.memory_space<vmem>>, vector<1x8x128xf32>
      %81 = vector.shape_cast %80 : vector<1x8x128xf32> to vector<8x128xf32>
      %82 = vector.shape_cast %79 : vector<8x128xf32> to vector<1x8x128xf32>
      tpu.vector_store %arg4[%c0_38, %c0_39, %c0_40], %82 {strides = array<i32>} : memref<1x8x128xf32, #tpu.memory_space<vmem>>, vector<1x8x128xf32>,
    } else {
    }
    return
  }
  func.func @transform_0(%arg0: i32, %arg1: i32) -> (i32, i32, i32) {
    %c0_i32 = arith.constant 0 : i32
    %c0_i32_0 = arith.constant 0 : i32
    return %arg0, %c0_i32, %arg1 : i32, i32, i32
  }
  func.func @transform_1(%arg0: i32, %arg1: i32) -> (i32, i32, i32) {
    %c0_i32 = arith.constant 0 : i32
    %c0_i32_0 = arith.constant 0 : i32
    return %arg0, %c0_i32, %arg1 : i32, i32, i32
  }
  func.func @transform_2(%arg0: i32, %arg1: i32) -> (i32, i32, i32) {
    %c0_i32 = arith.constant 0 : i32
    %c0_i32_0 = arith.constant 0 : i32
    %c0_i32_1 = arith.constant 0 : i32
    return %arg0, %c0_i32, %c0_i32_0 : i32, i32, i32
  }
}

</mosaic_0001>

<llo_original>
// kernel: tpu_custom_call.1
$region0: #{tpu_custom_call.1}
  #allocation0 [shape = 'u32[]', space=smem, size = 0x4, offset = 0x4, fixed_abs, tag = 'smem constant byte address 0x4 - core index']
  #allocation1 [shape = 'u32[144,128]{1,0:T(1,128)}', space=vmem, size = 0x12000, scoped, tag = 'internal scratch']
  #allocation2 [shape = 'f32[8,256]{1,0:T(8,128)}', space=vmem, size = 0x2000, scoped, tag = 'scratch operand']
  %s0 = inlined_call_operand.vmem [shape: f32[2,9,256], index: 0, kind: input, shape index: {}]
  %s1 = inlined_call_operand.vmem [shape: f32[2,9,256], index: 1, kind: input, shape index: {}]
  %s2 = inlined_call_operand.hbm [shape: f32[2,8,128], index: 2, kind: output, shape index: {}]
  %s3 = sld [smem:[#allocation0]]
  $region49: #{tpu_custom_call.1} parent=0
    _
  %s5 = ssub.s32 1, %s3
  %s6 = scalar_select 0, %s5, %s3
  $region1: #{tpu_custom_call.1} parent=0
    #allocation3 [shape = 'u8[8192]{0}', space=vmem, size = 0x2000, scoped, tag = 'output window, operand 0']
    #allocation4 [shape = 's32[2]{0}', space=sflag, size = 0x8, scoped, tag = 'scoped memory for tpu_custom_call.1']
    %7 = vsyncpa [#allocation4], 0
    %s8 = scalar_lea.sflag [#allocation4], 1
    %9 = vsyncpa %s8, 0
    loop: start=0, step=1, limit=4
    $region2: #{tpu_custom_call.1} parent=1 // loop_pre_header
      _
    $region3: #{tpu_custom_call.1} parent=1 // loop_header
      %s11 = sphi 0, %s15
      %p12 = scmp.ge.s32.totalorder %s11, 4
      %s18 = sphi 0, %s30
      %s19 = sphi 0, %s26
      %s20 = sphi 0, %s18
      %s21 = sphi 0, %s19
      %s22 = sphi 0, %s20
      %s23 = sphi 0, %s21
      %s35 = sphi 0, %s37
      %s38 = sphi 0, %s35
      %s39 = sphi 0, %s38
      %s55 = sphi 0, %s39
      %s63 = sphi 0, %s65
      %s66 = sphi 0, %s63
      %s67 = sphi 0, %s66
      %s83 = sphi 0, %s67
      %s89 = sphi 0, %s91
      %s92 = sphi 0, %s89
      %s93 = sphi 0, %s92
      %s109 = sphi 0, %s93
    $region4: #{tpu_custom_call.1} parent=1 // loop_header_branch
      %14 = sbr.rel (%p12) target = $region8
    $region5: #{tpu_custom_call.1} parent=1 // loop_body
      %s16 = ssub.s32 %s11, 1
      %s17 = ssub.s32 %s11, 2
      %s24 = sadd.s32 1, %s19
      %p25 = scmp.ge.s32.totalorder %s24, 1
      %s26 = scalar_select %p25, 0, %s24
      %s27 = sadd.s32 1, %s18
      %s28 = scalar_select %p25, %s27, %s18
      %p29 = scmp.ge.s32.totalorder %s28, 2
      %s30 = scalar_select %p29, 0, %s28
      %s31 = ssub.s32 %s18, %s30
      %s32 = ssub.s32 %s19, %s26
      %s33 = sor.u32 %s31, %s32
      %p34 = scmp.eq.s32.totalorder %s33, 0
      %s36 = sadd.s32 %s35, 1
      %s37 = scalar_select %p34, %s35, %s36
      %p40 = pneg %p34
      %p41 = scmp.eq.s32.totalorder %s11, 1
      %p42 = por %p40, %p41
      %p43 = scmp.ne.s32.totalorder %s35, %s38
      %p44 = scmp.eq.s32.totalorder %s11, 0
      %p45 = por %p43, %p44
      %p46 = scmp.ne.s32.totalorder %s35, %s38
      %p47 = scmp.eq.s32.totalorder %s16, 1
      %p48 = por %p46, %p47
      %p49 = scmp.ne.s32.totalorder %s38, %s39
      %p50 = scmp.eq.s32.totalorder %s16, 0
      %p51 = por %p49, %p50
      %p52 = scmp.ne.s32.totalorder %s38, %s39
      %p53 = scmp.eq.s32.totalorder %s17, 1
      %p54 = por %p52, %p53
      %p56 = scmp.ne.s32.totalorder %s39, %s55
      %p57 = scmp.eq.s32.totalorder %s17, 0
      %p58 = por %p56, %p57
      %s59 = ssub.s32 %s18, %s30
      %s60 = ssub.s32 %s19, %s26
      %s61 = sor.u32 %s59, %s60
      %p62 = scmp.eq.s32.totalorder %s61, 0
      %s64 = sadd.s32 %s63, 1
      %s65 = scalar_select %p62, %s63, %s64
      %p68 = pneg %p62
      %p69 = scmp.eq.s32.totalorder %s11, 1
      %p70 = por %p68, %p69
      %p71 = scmp.ne.s32.totalorder %s63, %s66
      %p72 = scmp.eq.s32.totalorder %s11, 0
      %p73 = por %p71, %p72
      %p74 = scmp.ne.s32.totalorder %s63, %s66
      %p75 = scmp.eq.s32.totalorder %s16, 1
      %p76 = por %p74, %p75
      %p77 = scmp.ne.s32.totalorder %s66, %s67
      %p78 = scmp.eq.s32.totalorder %s16, 0
      %p79 = por %p77, %p78
      %p80 = scmp.ne.s32.totalorder %s66, %s67
      %p81 = scmp.eq.s32.totalorder %s17, 1
      %p82 = por %p80, %p81
      %p84 = scmp.ne.s32.totalorder %s67, %s83
      %p85 = scmp.eq.s32.totalorder %s17, 0
      %p86 = por %p84, %p85
      %s87 = ssub.s32 %s18, %s30
      %p88 = scmp.eq.s32.totalorder %s87, 0
      %s90 = sadd.s32 %s89, 1
      %s91 = scalar_select %p88, %s89, %s90
      %p94 = pneg %p88
      %p95 = scmp.eq.s32.totalorder %s11, 1
      %p96 = por %p94, %p95
      %p97 = scmp.ne.s32.totalorder %s89, %s92
      %p98 = scmp.eq.s32.totalorder %s11, 0
      %p99 = por %p97, %p98
      %p100 = scmp.ne.s32.totalorder %s89, %s92
      %p101 = scmp.eq.s32.totalorder %s16, 1
      %p102 = por %p100, %p101
      %p103 = scmp.ne.s32.totalorder %s92, %s93
      %p104 = scmp.eq.s32.totalorder %s16, 0
      %p105 = por %p103, %p104
      %p106 = scmp.ne.s32.totalorder %s92, %s93
      %p107 = scmp.eq.s32.totalorder %s17, 1
      %p108 = por %p106, %p107
      %p110 = scmp.ne.s32.totalorder %s93, %s109
      %p111 = scmp.eq.s32.totalorder %s17, 0
      %p112 = por %p110, %p111
      %p113 = scmp.le.s32.totalorder 1, %s11
      %p114 = scmp.lt.s32.totalorder %s11, 3
      %p115 = pnand %p113, %p114
      %p116 = pneg %p115
      // Predicated region
      $region9: #{tpu_custom_call.1} parent=5 // pred_check
        _
      $region10: #{tpu_custom_call.1} parent=5 // pred_check_branch
        %118 = sbr.rel (%p115) target = $region12
      $region11: #{tpu_custom_call.1} parent=5 // pred_region
        %s119 = ssub.s32 %s11, 1
      $region12: #{tpu_custom_call.1} parent=5 // pred_fallthru
        _
      %p120 = scmp.lt.s32.totalorder %s11, 2
      // Predicated region
      $region13: #{tpu_custom_call.1} parent=5 // pred_check
        %p121 = pneg %p120
      $region14: #{tpu_custom_call.1} parent=5 // pred_check_branch
        %123 = sbr.rel (%p121) target = $region16
      $region15: #{tpu_custom_call.1} parent=5 // pred_region
        // Predicated region
        $region17: #{tpu_custom_call.1} parent=15 // pred_check
          %p124 = pneg %p45
        $region18: #{tpu_custom_call.1} parent=15 // pred_check_branch
          %126 = sbr.rel (%p124) target = $region20
        $region19: #{tpu_custom_call.1} parent=15 // pred_region
          %s127 = smul.u32 2, %s19
          %p128 = scmp.lt.s32.totalorder %s18, 1
          %s129 = scalar_select %p128, %s18, 1
          %p130 = scmp.lt.s32.totalorder %s127, 1
          %s131 = scalar_select %p130, %s127, 1
          %s132 = smul.addr %s129, 4
          %s133 = sadd.s32 %s131, %s132
          %s134 = smul.addr %s133, 8
          %s135 = scalar_lea.vmem %s0, %s134
          %s136 = smul.u32 2, %s19
        $region20: #{tpu_custom_call.1} parent=15 // pred_fallthru
          _
        // Predicated region
        $region21: #{tpu_custom_call.1} parent=15 // pred_check
          %p137 = pneg %p73
        $region22: #{tpu_custom_call.1} parent=15 // pred_check_branch
          %139 = sbr.rel (%p137) target = $region24
        $region23: #{tpu_custom_call.1} parent=15 // pred_region
          %s140 = smul.u32 2, %s19
          %p141 = scmp.lt.s32.totalorder %s18, 1
          %s142 = scalar_select %p141, %s18, 1
          %p143 = scmp.lt.s32.totalorder %s140, 1
          %s144 = scalar_select %p143, %s140, 1
          %s145 = smul.addr %s142, 4
          %s146 = sadd.s32 %s144, %s145
          %s147 = smul.addr %s146, 8
          %s148 = scalar_lea.vmem %s1, %s147
          %s149 = smul.u32 2, %s19
        $region24: #{tpu_custom_call.1} parent=15 // pred_fallthru
          _
      $region16: #{tpu_custom_call.1} parent=5 // pred_fallthru
        _
      %p150 = scmp.le.s32.totalorder 1, %s11
      %p151 = scmp.lt.s32.totalorder %s11, 3
      %p152 = pnand %p150, %p151
      %p153 = pneg %p152
      // Predicated region
      $region25: #{tpu_custom_call.1} parent=5 // pred_check
        _
      $region26: #{tpu_custom_call.1} parent=5 // pred_check_branch
        %155 = sbr.rel (%p152) target = $region28
      $region27: #{tpu_custom_call.1} parent=5 // pred_region
        %s156 = ssub.s32 %s11, 1
        %s157 = smul.u32 2, %s21
        %p158 = scmp.lt.s32.totalorder %s20, 1
        %s159 = scalar_select %p158, %s20, 1
        %p160 = scmp.lt.s32.totalorder %s157, 1
        %s161 = scalar_select %p160, %s157, 1
        %s162 = smul.addr %s159, 4
        %s163 = sadd.s32 %s161, %s162
        %s164 = smul.addr %s163, 8
        %s165 = scalar_lea.vmem %s0, %s164
        %p166 = pneg %p51
        %p167 = pneg %p48
        %s168 = smul.u32 2, %s21
        %p169 = scmp.lt.s32.totalorder %s20, 1
        %s170 = scalar_select %p169, %s20, 1
        %p171 = scmp.lt.s32.totalorder %s168, 1
        %s172 = scalar_select %p171, %s168, 1
        %s173 = smul.addr %s170, 4
        %s174 = sadd.s32 %s172, %s173
        %s175 = smul.addr %s174, 8
        %s176 = scalar_lea.vmem %s1, %s175
        %p177 = pneg %p79
        %p178 = pneg %p76
        %p179 = pneg %p105
        %p180 = pneg %p102
        %s181 = sand.u32 %s92, 1
        %s182 = scalar_lea.sflag [#allocation4], %s181
        %s183 = sand.u32 %s92, 1
        %s184 = smul.addr %s183, 8
        %s185 = scalar_lea.vmem [#allocation3], %s184
        %s186 = smul.u32 2, %s21
        %p187 = scmp.lt.s32.totalorder %s20, 1
        %s188 = scalar_select %p187, %s20, 1
        %p189 = scmp.lt.s32.totalorder %s186, 1
        %s190 = scalar_select %p189, %s186, 1
        %s191 = smul.addr %s188, 4
        %s192 = sadd.s32 %s190, %s191
        %s193 = smul.addr %s192, 8
        %s194 = scalar_lea.vmem %s0, %s193
        %s195 = smul.u32 2, %s21
        %s196 = smul.u32 2, %s21
        %p197 = scmp.lt.s32.totalorder %s20, 1
        %s198 = scalar_select %p197, %s20, 1
        %p199 = scmp.lt.s32.totalorder %s196, 1
        %s200 = scalar_select %p199, %s196, 1
        %s201 = smul.addr %s198, 4
        %s202 = sadd.s32 %s200, %s201
        %s203 = smul.addr %s202, 8
        %s204 = scalar_lea.vmem %s1, %s203
        %s205 = smul.u32 2, %s21
        %p206 = scmp.eq.s32.totalorder %s21, 0
        // Predicated region
        $region29: #{tpu_custom_call.1} parent=27 // pred_check
          %p207 = pneg %p206
        $region30: #{tpu_custom_call.1} parent=27 // pred_check_branch
          %209 = sbr.rel (%p207) target = $region32
        $region31: #{tpu_custom_call.1} parent=27 // pred_region
          %210 = vst [vmem:[#allocation2] sm:$0xff] 0.0
          %211 = vst [vmem:[#allocation2 + $0x8] sm:$0xff] 0.0
        $region32: #{tpu_custom_call.1} parent=27 // pred_fallthru
          _
        %v212 = vld [vmem:[%s194] ss:$8 sm:$0x3]
        %v213 = vld [vmem:[%s194] sm:$0x1e]
        %v214 = vld [vmem:[%s194 + $0x8] sm:$0x1e]
        %v215 = vld [vmem:[%s194] sm:$0xe0]
        %v216 = vld [vmem:[%s194 + $0x8] sm:$0xe0]
        %v217 = vld [vmem:[%s194 + $0x10] sm:$0x1]
        %v218 = vld [vmem:[%s194 + $0x18] sm:$0x1]
        %v219 = vld [vmem:[%s204] ss:$8 sm:$0x3]
        %v220 = vld [vmem:[%s204] sm:$0x1e]
        %v221 = vld [vmem:[%s204 + $0x8] sm:$0x1e]
        %v222 = vld [vmem:[%s204] sm:$0xe0]
        %v223 = vld [vmem:[%s204 + $0x8] sm:$0xe0]
        %v224 = vld [vmem:[%s204 + $0x10] sm:$0x1]
        %v225 = vld [vmem:[%s204 + $0x18] sm:$0x1]
        %vm226 = vcmp.ge.f32.partialorder %v219, 0.5
        %v227 = vsel %vm226, 1, 0
        %v228 = vcvt.s32.f32 %v227
        %v229 = vsub.f32 %v212, %v219
        %v230 = vsub.f32 %v213, %v220
        %v231 = vsub.f32 %v214, %v221
        %v232 = vmul.f32 %v230, %v230
        %v233 = vmul.f32 %v231, %v231
        %v235 = vlaneseq
        %v236 = vshrl.u32 %v235, 7
        %v237 = vsub.s32 0, %v236
        %v238 = vrot.slane %v228, %v237
        %v239 = vlaneseq
        %v240 = vshrl.u32 %v239, 7
        %v241 = vsub.s32 1, %v240
        %v242 = vrot.slane %v228, %v241
        %v245 = vmul.f32 %v238, %v232
        %v246 = vmul.f32 %v242, %v233
        %v247 = vmul.f32 %v215, %v238
        %v248 = vmul.f32 %v216, %v242
        %v249 = vmul.f32 %v217, %v238
        %v250 = vmul.f32 %v218, %v242
        %v251 = vmul.f32 %v222, %v238
        %v252 = vmul.f32 %v223, %v242
        %v253 = vmul.f32 %v224, %v238
        %v254 = vmul.f32 %v225, %v242
        %v255 = vlaneseq
        %v256 = vshrl.u32 %v255, 7
        %vm257 = vcmask 1047557
        %v258 = vsel %vm257, %v251, -inf
        %vm259 = vcmask 1040384
        %v260 = vsel %vm259, %v253, -inf
        %v261 = vmax.f32 %v258, %v260
        %v262 = vrot.slane %v261, 4
        %v263 = vmax.f32 %v261, %v262
        %v264 = vrot.slane %v263, 2
        %v265 = vmax.f32 %v263, %v264
        %v266 = vrot.slane %v265, 1
        %v267 = vmax.f32 %v265, %v266
        %v268 = vsel %vm257, %v252, -inf
        %v269 = vsel %vm259, %v254, -inf
        %v270 = vmax.f32 %v268, %v269
        %v271 = vrot.slane %v270, 4
        %v272 = vmax.f32 %v270, %v271
        %v273 = vrot.slane %v272, 2
        %v274 = vmax.f32 %v272, %v273
        %v275 = vrot.slane %v274, 1
        %v276 = vmax.f32 %v274, %v275
        %vm277 = vcmp.eq.f32.partialorder %v251, %v267
        %vm278 = vcmp.eq.f32.partialorder %v252, %v276
        %vm279 = vcmp.eq.f32.partialorder %v253, %v267
        %vm280 = vcmp.eq.f32.partialorder %v254, %v276
        %v281 = vrot.slane %v256, 3
        %v282 = vsel %vm277, %v281, 4
        %v283 = vsel %vm278, %v281, 4
        %v284 = vsel %vm279, %v281, 4
        %v285 = vsel %vm280, %v281, 4
        %v286 = vsel %vm257, %v282, 2147483647
        %v287 = vsel %vm259, %v284, 2147483647
        %vm288 = vcmp.lt.s32.totalorder %v286, %v287
        %v289 = vsel %vm288, %v286, %v287
        %v290 = vrot.slane %v289, 4
        %vm291 = vcmp.lt.s32.totalorder %v289, %v290
        %v292 = vsel %vm291, %v289, %v290
        %v293 = vrot.slane %v292, 2
        %vm294 = vcmp.lt.s32.totalorder %v292, %v293
        %v295 = vsel %vm294, %v292, %v293
        %v296 = vrot.slane %v295, 1
        %vm297 = vcmp.lt.s32.totalorder %v295, %v296
        %v298 = vsel %vm297, %v295, %v296
        %v299 = vsel %vm257, %v283, 2147483647
        %v300 = vsel %vm259, %v285, 2147483647
        %vm301 = vcmp.lt.s32.totalorder %v299, %v300
        %v302 = vsel %vm301, %v299, %v300
        %v303 = vrot.slane %v302, 4
        %vm304 = vcmp.lt.s32.totalorder %v302, %v303
        %v305 = vsel %vm304, %v302, %v303
        %v306 = vrot.slane %v305, 2
        %vm307 = vcmp.lt.s32.totalorder %v305, %v306
        %v308 = vsel %vm307, %v305, %v306
        %v309 = vrot.slane %v308, 1
        %vm310 = vcmp.lt.s32.totalorder %v308, %v309
        %v311 = vsel %vm310, %v308, %v309
        %vm312 = vcmp.eq.s32.totalorder %v256, %v298
        %vm313 = vcmp.eq.s32.totalorder %v256, %v311
        %vm318 = vcmask 1042432
        %v319 = vrot.slane %v247, 5
        %v320 = vrot.slane %v249, 5
        %v321 = vsel %vm318, %v319, %v320
        %v322 = vrot.slane %v248, 5
        %v323 = vrot.slane %v250, 5
        %v324 = vsel %vm318, %v322, %v323
        %v327 = vsel %vm312, %v321, 0.0
        %v328 = vsel %vm313, %v324, 0.0
        %vm329 = vcmask 1043456
        %v330 = vsel %vm329, %v327, 0.0
        %v331 = vrot.slane %v330, 4
        %v332 = vadd.f32 %v330, %v331
        %v333 = vrot.slane %v332, 2
        %v334 = vadd.f32 %v332, %v333
        %v335 = vrot.slane %v334, 1
        %v336 = vadd.f32 %v334, %v335
        %v337 = vsel %vm329, %v328, 0.0
        %v338 = vrot.slane %v337, 4
        %v339 = vadd.f32 %v337, %v338
        %v340 = vrot.slane %v339, 2
        %v341 = vadd.f32 %v339, %v340
        %v342 = vrot.slane %v341, 1
        %v343 = vadd.f32 %v341, %v342
        %v344 = vsel %vm257, %v247, -inf
        %v345 = vsel %vm259, %v249, -inf
        %v346 = vmax.f32 %v344, %v345
        %v347 = vrot.slane %v346, 4
        %v348 = vmax.f32 %v346, %v347
        %v349 = vrot.slane %v348, 2
        %v350 = vmax.f32 %v348, %v349
        %v351 = vrot.slane %v350, 1
        %v352 = vmax.f32 %v350, %v351
        %v353 = vsel %vm257, %v248, -inf
        %v354 = vsel %vm259, %v250, -inf
        %v355 = vmax.f32 %v353, %v354
        %v356 = vrot.slane %v355, 4
        %v357 = vmax.f32 %v355, %v356
        %v358 = vrot.slane %v357, 2
        %v359 = vmax.f32 %v357, %v358
        %v360 = vrot.slane %v359, 1
        %v361 = vmax.f32 %v359, %v360
        %v362 = vsub.f32 %v247, %v352
        %v363 = vsub.f32 %v248, %v361
        %v364 = vsub.f32 %v249, %v352
        %v365 = vsub.f32 %v250, %v361
        %v366 = vmul.f32 %v362, 1.442695
        %v367 = vpow.pop %v366
        %v368 = vmul.f32 %v363, 1.442695
        %v369 = vpow.pop %v368
        %v370 = vmul.f32 %v364, 1.442695
        %v371 = vpow.pop %v370
        %v372 = vmul.f32 %v365, 1.442695
        %v373 = vpow.pop %v372
        %v378 = vrot.slane %v367, 5
        %v379 = vrot.slane %v371, 5
        %v380 = vsel %vm318, %v378, %v379
        %v381 = vrot.slane %v369, 5
        %v382 = vrot.slane %v373, 5
        %v383 = vsel %vm318, %v381, %v382
        %v386 = vsel %vm329, %v380, 0.0
        %v387 = vrot.slane %v386, 4
        %v388 = vadd.f32 %v386, %v387
        %v389 = vrot.slane %v388, 2
        %v390 = vadd.f32 %v388, %v389
        %v391 = vrot.slane %v390, 1
        %v392 = vadd.f32 %v390, %v391
        %v393 = vsel %vm329, %v383, 0.0
        %v394 = vrot.slane %v393, 4
        %v395 = vadd.f32 %v393, %v394
        %v396 = vrot.slane %v395, 2
        %v397 = vadd.f32 %v395, %v396
        %v398 = vrot.slane %v397, 1
        %v399 = vadd.f32 %v397, %v398
        %v400 = vlog2.pop %v392
        %v401 = vmul.f32 %v400, 0.6931472
        %v402 = vlog2.pop %v399
        %v403 = vmul.f32 %v402, 0.6931472
        %v404 = vadd.f32 %v352, %v401
        %v405 = vadd.f32 %v361, %v403
        %v406 = vsub.f32 %v404, %v336
        %v407 = vsub.f32 %v405, %v343
        %v408 = vld [vmem:[#allocation2] sm:$0xf]
        %v409 = vld [vmem:[#allocation2 + $0x8] sm:$0xf]
        %v412 = vrot.slane %v245, 1
        %v413 = vrot.slane %v246, 1
        %v416 = vadd.f32 %v408, %v412
        %v417 = vadd.f32 %v409, %v413
        %418 = vst [vmem:[#allocation2] sm:$0xf] %v416
        %419 = vst [vmem:[#allocation2 + $0x8] sm:$0xf] %v417
        %s420 = scalar_lea.vmem [#allocation2], 4
        %v421 = vld [vmem:[%s420] ss:$8 sm:$0x3]
        %v422 = vmul.f32 %v229, %v229
        %v425 = vcombine.low %v406, %v407
        %v427 = vunpack.c.l.s4 1966171168
        %v428 = vunpack.c.0.s8 %v427
        %v429 = vlaneseq
        %v430 = vshrl.u32 %v429, 7
        %v431 = vsub.s32 %v428, %v430
        %v432 = vrot.slane %v425, %v431
        %v434 = vunpack.c.l.s4 1966171168
        %v435 = vunpack.c.0.s8 %v434
        %v436 = vlaneseq
        %v437 = vshrl.u32 %v436, 7
        %v438 = vsub.s32 %v435, %v437
        %v439 = vrot.slane %v432, %v438
        %v441 = vadd.f32 %v422, %v439
        %v442 = vadd.f32 %v421, %v441
        %v443 = vlaneseq
        %vm444 = vcmp.ge.s32.totalorder %v443, 0
        %vm445 = vcmp.lt.s32.totalorder %v443, 256
        %vm446 = vmand %vm444, %vm445
        %447 = vst.msk [vmem:[%s420] ss:$8 sm:$0x3] %vm446, %v442
        %448 = vst.msk [vmem:[%s420] ss:$8 sm:$0x0] %vm446, %v442
        // Predicated region
        $region33: #{tpu_custom_call.1} parent=27 // pred_check
          %p449 = pneg %p206
        $region34: #{tpu_custom_call.1} parent=27 // pred_check_branch
          %451 = sbr.rel (%p449) target = $region36
        $region35: #{tpu_custom_call.1} parent=27 // pred_region
          %v452 = vld [vmem:[#allocation2] sm:$0xff]
          %v453 = vld [vmem:[#allocation2 + $0x8] sm:$0xff]
          %v454 = vadd.f32 %v452, %v453
          %455 = vadd.xlane.f32.xlu0 %v454
          %v456 = vpop.xlane.xlu0 %455
          %v457 = vrot.slane %v456, 4
          %v458 = vadd.f32 %v456, %v457
          %v459 = vrot.slane %v458, 2
          %v460 = vadd.f32 %v458, %v459
          %v461 = vrot.slane %v460, 1
          %v462 = vadd.f32 %v460, %v461
          %s463 = vtos %v462
          %s464 = smul.f32 %s463, 0.001953125
          %v465 = vlaneseq
          %v466 = vand.u32 %v465, 127
          %vm467 = vcmp.eq.s32.totalorder %v256, 0
          %vm468 = vcmp.eq.s32.totalorder %v466, 0
          %vm469 = vmand %vm467, %vm468
          %v470 = vstv %s464
          %v471 = vsel %vm469, %v470, 0.0
          %472 = vst [vmem:[%s185] sm:$0xff] %v471
        $region36: #{tpu_custom_call.1} parent=27 // pred_fallthru
          _
        %s473 = sand.u32 %s92, 1
        %s474 = scalar_lea.sflag [#allocation4], %s473
        %s475 = sand.u32 %s92, 1
        %s476 = smul.addr %s475, 8
        %s477 = scalar_lea.vmem [#allocation3], %s476
        // Predicated region
        $region37: #{tpu_custom_call.1} parent=27 // pred_check
          %p478 = pneg %p102
        $region38: #{tpu_custom_call.1} parent=27 // pred_check_branch
          %480 = sbr.rel (%p478) target = $region40
        $region39: #{tpu_custom_call.1} parent=27 // pred_region
          %s482 = ssub.s32 128, 128
          %483 = vsyncadd %s474, %s482
          %s484 = smul.addr %s20, 128
          %s485 = scalar_lea.hbm %s2, %s484
          %s487 = sshll.u32 %s477, 4
          %s488 = int_to_ptr.vmem [resolvable:$true] %s487
          %490 = dma.vmem_to_hbm [thread:$0]  %s488, 128, %s485, %s474
        $region40: #{tpu_custom_call.1} parent=27 // pred_fallthru
          _
      $region28: #{tpu_custom_call.1} parent=5 // pred_fallthru
        _
      %p491 = scmp.le.s32.totalorder 2, %s11
      // Predicated region
      $region41: #{tpu_custom_call.1} parent=5 // pred_check
        %p492 = pneg %p491
      $region42: #{tpu_custom_call.1} parent=5 // pred_check_branch
        %494 = sbr.rel (%p492) target = $region44
      $region43: #{tpu_custom_call.1} parent=5 // pred_region
        %s495 = ssub.s32 %s11, 2
        // Predicated region
        $region45: #{tpu_custom_call.1} parent=43 // pred_check
          %p496 = pneg %p108
        $region46: #{tpu_custom_call.1} parent=43 // pred_check_branch
          %498 = sbr.rel (%p496) target = $region48
        $region47: #{tpu_custom_call.1} parent=43 // pred_region
          %s499 = sand.u32 %s93, 1
          %s500 = scalar_lea.sflag [#allocation4], %s499
          %s501 = sand.u32 %s93, 1
          %s502 = smul.addr %s501, 8
          %s503 = scalar_lea.vmem [#allocation3], %s502
          %504 = dma.done %s500, 128
        $region48: #{tpu_custom_call.1} parent=43 // pred_fallthru
          _
      $region44: #{tpu_custom_call.1} parent=5 // pred_fallthru
        _
    $region6: #{tpu_custom_call.1} parent=1 // loop_footer
      %s15 = sadd.s32 1, %s11
    $region7: #{tpu_custom_call.1} parent=1 // loop_footer_branch
      %10 = sbr.rel target = $region3
    $region8: #{tpu_custom_call.1} parent=1 // loop_exit
      _
    %505 = vsyncpa [#allocation4], 1
    %s506 = scalar_lea.sflag [#allocation4], 1
    %507 = vsyncpa %s506, 1

</llo_original>
